<compile_context>
chip_gen: v5e
topology: v5e:2x2
jax: 0.10.0
libtpu: 0.0.40
codegen_flags: <defaults>
</compile_context>

<pallas_src>
import math

import jax
import jax.numpy as jnp
from jax.experimental import pallas as pl
from jax.experimental.pallas import tpu as pltpu


def _dma_copy_kernel(x_hbm_ref, o_hbm_ref, sem):
    # Single large contiguous HBM->HBM DMA: no VMEM staging, no vld/vst
    # round trip, no tiling constraints.  Bandwidth-bound on every generation.
    cp = pltpu.make_async_copy(x_hbm_ref, o_hbm_ref, sem)
    cp.start()
    cp.wait()


def _materialized_copy(x2d: jax.Array) -> jax.Array:
    """Copy (n, flat) array into a fresh buffer via one HBM->HBM DMA."""
    n, flat = x2d.shape
    return pl.pallas_call(
        _dma_copy_kernel,
        out_shape=jax.ShapeDtypeStruct((n, flat), x2d.dtype),
        in_specs=[pl.BlockSpec(memory_space=pl.ANY)],
        out_specs=pl.BlockSpec(memory_space=pl.ANY),
        scratch_shapes=[pltpu.SemaphoreType.DMA(())],
    )(x2d)


def flatten(x: jax.Array, *, materialize: bool = False) -> jax.Array:
    """Pallas equivalent of `x.view(x.shape[0], -1)`.

    Default: metadata-only reshape (exactly what PyTorch's .view does on a
    contiguous tensor; zero HBM traffic).  Pass materialize=True to force a
    fresh output buffer via the Pallas HBM->HBM DMA kernel (useful as a
    materialization / fusion point inside larger Pallas pipelines).
    """
    n = x.shape[0]
    # Matches x.view(n, -1): a 1-D input of shape (n,) becomes (n, 1).
    flat = math.prod(x.shape[1:]) if x.ndim > 1 else 1

    x2d = x.reshape(n, flat)  # metadata-only: this IS the flatten
    if not materialize:
        return x2d
    return _materialized_copy(x2d)


if __name__ == "__main__":
    key = jax.random.PRNGKey(0)

    # CNN-feature-map-like input: (N, C, H, W)
    x = jax.random.normal(key, (2, 4, 16, 16), dtype=jnp.float32)
    y_ref = x.reshape(x.shape[0], -1)

    # Pallas (materializing, single HBM->HBM DMA) path.
    y = flatten(x, materialize=True)
    jax.block_until_ready(y)
    assert y.shape == (2, 4 * 16 * 16), y.shape
    assert jnp.array_equal(y, y_ref), "Pallas flatten mismatch vs reference"

    # Default (metadata-only reshape) path.
    y0 = flatten(x)
    jax.block_until_ready(y0)
    assert y0.shape == (2, 4 * 16 * 16), y0.shape
    assert jnp.array_equal(y0, y_ref), "reshape flatten mismatch vs reference"

    # Non-128-aligned flattened dim + larger batch: exercises the
    # shape-agnostic DMA path (no tiling constraints to satisfy).
    x2 = jax.random.normal(jax.random.PRNGKey(0), (16, 3, 10, 13), dtype=jnp.float32)
    y2 = flatten(x2, materialize=True)
    jax.block_until_ready(y2)
    assert y2.shape == (16, 3 * 10 * 13), y2.shape
    assert jnp.array_equal(y2, x2.reshape(16, -1)), "mismatch on ragged case"

    print("KERNEL_OK")
</pallas_src>

<mosaic_0001>
module attributes {stable_mosaic.version = 11 : i64} {
  func.func @_dma_copy_kernel(%arg0: memref<2x1024xf32, #tpu.memory_space<any>>, %arg1: memref<2x1024xf32, #tpu.memory_space<any>>, %arg2: memref<!tpu.dma_semaphore, #tpu.memory_space<semaphore_mem>>) attributes {dimension_semantics = [], scalar_prefetch = 0 : i64, scratch_operands = 1 : i64, tpu.core_type = #tpu.core_type<tc>} {
    tpu.enqueue_dma source(%arg0 : memref<2x1024xf32, #tpu.memory_space<any>>) target(%arg1 : memref<2x1024xf32, #tpu.memory_space<any>>) target_semaphore(%arg2 : memref<!tpu.dma_semaphore, #tpu.memory_space<semaphore_mem>>)
    tpu.wait_dma2 semaphore(%arg2 : memref<!tpu.dma_semaphore, #tpu.memory_space<semaphore_mem>>) src(%arg0 : memref<2x1024xf32, #tpu.memory_space<any>>) dst(%arg1 : memref<2x1024xf32, #tpu.memory_space<any>>)
    return
  }
}

</mosaic_0001>

<llo_original>
// kernel: tpu_custom_call.1
$region0: #{tpu_custom_call.1}
  #allocation0 [shape = 'u32[]', space=smem, size = 0x4, offset = 0x4, fixed_abs, tag = 'smem constant byte address 0x4 - core index']
  #allocation1 [shape = 'u32[72,128]{1,0:T(1,128)}', space=vmem, size = 0x9000, scoped, tag = 'internal scratch']
  #allocation2 [shape = 's32[1]{0}', space=sflag, size = 0x4, scoped, tag = 'scratch operand']
  #allocation3 [shape = 's32[]', space=sflag, size = 0x4, offset = 0, fixed_abs, tag = 'sflag constant byte address 0x0 - dummy sync flag']
  #allocation4 [shape = 'u32[0]{0}', space=smem, size = 0, offset = 0, fixed_abs, tag = 'smem constant byte address 0x0 - null']
  %s0 = inlined_call_operand.hbm [shape: f32[2,1024], index: 0, kind: input, shape index: {}]
  %s1 = inlined_call_operand.hbm [shape: f32[2,1024], index: 1, kind: output, shape index: {}]
  %s2 = sld [smem:[#allocation0]]
  $region2: #{tpu_custom_call.1} parent=0
    _
  %s4 = ssub.s32 1, %s2
  %s5 = scalar_select 0, %s4, %s2
  %s7 = sshll.u32 1, 14
  %s8 = sxor.u32 4294967295, %s7
  %s10 = sshll.u32 %s0, 4
  %s11 = int_to_ptr.hbm [resolvable:$true] %s10
  %s12 = sshll.u32 %s1, 4
  %s13 = int_to_ptr.hbm [resolvable:$true] %s12
  %16 = dma.general %s11, 256, %s13, [#allocation2], [#allocation3], [#allocation4], 0, 0
  %s17 = smul.u32 2, 1
  %s18 = smul.u32 %s17, 8
  %s19 = sshll.u32 %s18, 4
  %20 = dma.done [#allocation2], %s19
  %21 = vsyncmov [#allocation2]
  %s22 = vpop.sfrf %21
  %p23 = scmp.eq.s32.totalorder %s22, 0
  %p24 = pneg %p23
  %26 = shalt.err (%p24)

</llo_original>
